<compile_context>
chip_gen: v5e
topology: v5e:2x2
jax: 0.10.0
libtpu: 0.0.40
codegen_flags: <defaults>
</compile_context>

<pallas_src>
import functools

import jax
import jax.numpy as jnp
from jax import lax
from jax.experimental import pallas as pl
from jax.experimental.pallas import tpu as pltpu

HIDDEN = 128  # attention bottleneck width fixed by the module (out_channels=128)


def _asp_kernel(x_ref, w1_ref, b1_ref, w2_ref, b2_ref, o_ref,
                m_acc, se_acc, sxe_acc, sxxe_acc, *, seq_len, block_t):
    t_idx = pl.program_id(1)

    # ---- init online-softmax accumulators at the first T tile --------------
    @pl.when(t_idx == 0)
    def _init():
        m_acc[...] = jnp.full_like(m_acc, -jnp.inf)
        se_acc[...] = jnp.zeros_like(se_acc)
        sxe_acc[...] = jnp.zeros_like(sxe_acc)
        sxxe_acc[...] = jnp.zeros_like(sxxe_acc)

    w1 = w1_ref[...]                                 # (HIDDEN, C)  mm dtype
    w2 = w2_ref[...]                                 # (C, HIDDEN)  mm dtype
    mm_dtype = w1.dtype
    C = w2.shape[0]
    block_b = x_ref.shape[0]
    # Biases are stored lane-major (1, N); reshape to column vectors once per
    # grid step (hoisted out of the per-sample loop).
    b1 = b1_ref[...].reshape(HIDDEN, 1).astype(jnp.float32)
    b2 = b2_ref[...].reshape(C, 1).astype(jnp.float32)

    # Mask for a ragged last T tile (static no-op when block_t divides T).
    ragged = (seq_len % block_t) != 0
    if ragged:
        col = lax.broadcasted_iota(jnp.int32, (1, block_t), 1)
        valid = (t_idx * block_t + col) < seq_len    # (1, block_t)

    # ---- per-sample work: rolled loop bounds live ranges to one sample -----
    @pl.loop(0, block_b)
    def _sample(i):
        xi = x_ref[i]                                # (C, block_t) native dtype
        xf = xi.astype(jnp.float32)                  # f32 statistics path

        # attention[0]: Conv1d(C -> 128, k=1), attention[1]: ReLU
        h = jnp.dot(w1, xi.astype(mm_dtype),
                    preferred_element_type=jnp.float32) + b1
        h = jnp.maximum(h, 0.0)                      # (HIDDEN, block_t)
        # attention[2]: Conv1d(128 -> C, k=1)
        logits = jnp.dot(w2, h.astype(mm_dtype),
                         preferred_element_type=jnp.float32) + b2  # (C, block_t)

        if ragged:
            logits = jnp.where(valid, logits, -jnp.inf)
            xf = jnp.where(valid, xf, 0.0)

        # attention[3]: softmax over T -- unnormalized tile statistics.
        m_t = jnp.max(logits, axis=-1, keepdims=True)        # (C, 1)
        e = jnp.exp(logits - m_t)                            # (C, block_t)
        xe = xf * e                                          # reused below
        s_e = jnp.sum(e, axis=-1, keepdims=True).reshape(1, C)
        s_xe = jnp.sum(xe, axis=-1, keepdims=True).reshape(1, C)
        s_xxe = jnp.sum(xe * xf, axis=-1, keepdims=True).reshape(1, C)
        m_row = m_t.reshape(1, C)

        # Online-softmax merge with the running accumulators for sample i.
        m_old = m_acc[i]                                     # (1, C)
        m_new = jnp.maximum(m_old, m_row)
        a_old = jnp.exp(m_old - m_new)
        a_new = jnp.exp(m_row - m_new)
        se_acc[i] = se_acc[i] * a_old + s_e * a_new
        sxe_acc[i] = sxe_acc[i] * a_old + s_xe * a_new
        sxxe_acc[i] = sxxe_acc[i] * a_old + s_xxe * a_new
        m_acc[i] = m_new

    # ---- finalize: batched stats + one lane-dense (block_b, 2C) store ------
    @pl.when(t_idx == pl.num_programs(1) - 1)
    def _finalize():
        se = se_acc[...].reshape(block_b, C)
        sxe = sxe_acc[...].reshape(block_b, C)
        sxxe = sxxe_acc[...].reshape(block_b, C)
        r = pl.reciprocal(se)          # exact: only (block_b, C), cost is tiny
        mean = sxe * r
        var = sxxe * r - mean * mean
        std = jnp.sqrt(jnp.maximum(var, 1e-5))
        out = jnp.concatenate([mean, std], axis=-1)          # (block_b, 2C)
        o_ref[...] = out[None].astype(o_ref.dtype)


def _physical_vmem_bytes():
    try:
        info = pltpu.get_tpu_info()
        for attr in ("vmem_capacity_bytes", "vmem_bytes", "vmem_size_bytes"):
            v = getattr(info, attr, None)
            if v:
                return int(v)
    except Exception:
        pass
    return 64 << 20        # conservative (v7x-sized) fallback


def asp_forward(x, w1, b1, w2, b2, *, block_b=None, block_t=None,
                compute_dtype=jnp.bfloat16, out_dtype=None):
    """x: (B, C, T) in its native dtype -> (B, 2C).  `compute_dtype` feeds the MXU."""
    B, C, T = x.shape
    assert w1.shape == (HIDDEN, C) and w2.shape == (C, HIDDEN)
    out_dtype = x.dtype if out_dtype is None else out_dtype
    x_isz = jnp.dtype(x.dtype).itemsize
    w_isz = jnp.dtype(compute_dtype).itemsize

    # ---- generation-aware VMEM budget (96 MiB on v5e/v6e, 48 MiB on v7x) ---
    vmem_budget = (_physical_vmem_bytes() * 3) // 4

    # ---- T tile candidates (multiple of 128 unless it covers the full T) ---
    if block_t is None:
        t_cands = [T] if T <= 512 else [512, 384, 256, 128]
    else:
        block_t = min(int(block_t), T)
        if block_t < T:
            assert block_t % 128 == 0, "partial T tiles must be multiples of 128"
        t_cands = [block_t]

    def est_vmem(d, tT):
        # Double-buffered x block + ONE sample's f32 intermediates (the batch
        # loop is rolled, so only one copy is live) + weights + accumulators.
        return (2 * d * C * tT * x_isz
                + (6 * C * tT + HIDDEN * tT) * 4
                + 4 * HIDDEN * C * w_isz
                + 4 * (HIDDEN + C) * 128 * 4 // 32      # lane-padded biases (approx)
                + 4 * d * 8 * C * 4
                + 4 * d * 2 * C * 4)

    def pick_block_b(tT):
        cands = [d for d in range(1, B + 1)
                 if B % d == 0 and d <= 8 and est_vmem(d, tT) <= vmem_budget]
        if not cands:
            return None

        def score(d):
            g = B // d
            # Prefer an even batch grid (>=2) so v7x's two TensorCores both work,
            # then the largest block (amortizes the ~0.35us/step grid overhead).
            return (g >= 2 and g % 2 == 0, g >= 2, d)

        return max(cands, key=score)

    if block_b is None:
        chosen = None
        for tT in t_cands:
            d = pick_block_b(tT)
            if d is not None:
                chosen = (d, tT)
                break
        if chosen is None:
            chosen = (1, t_cands[-1])
        block_b, block_t = chosen
    else:
        if block_t is None:
            block_t = t_cands[0]
    assert B % block_b == 0, (B, block_b)

    grid_b = B // block_b
    grid_t = pl.cdiv(T, block_t)

    b1_2d = b1.reshape(1, HIDDEN).astype(jnp.float32)
    b2_2d = b2.reshape(1, C).astype(jnp.float32)

    kernel = functools.partial(_asp_kernel, seq_len=T, block_t=block_t)

    cost = pl.CostEstimate(
        flops=4 * B * T * HIDDEN * C + 10 * B * C * T,
        transcendentals=B * C * T,
        bytes_accessed=(B * C * T * x_isz + 2 * HIDDEN * C * w_isz
                        + (HIDDEN + C) * 4
                        + B * 2 * C * jnp.dtype(out_dtype).itemsize),
    )

    out3d = pl.pallas_call(
        kernel,
        out_shape=jax.ShapeDtypeStruct((grid_b, block_b, 2 * C), out_dtype),
        grid_spec=pltpu.PrefetchScalarGridSpec(
            num_scalar_prefetch=0,
            grid=(grid_b, grid_t),
            in_specs=[
                pl.BlockSpec((block_b, C, block_t), lambda b, t: (b, 0, t)),
                pl.BlockSpec((HIDDEN, C), lambda b, t: (0, 0)),
                pl.BlockSpec((1, HIDDEN), lambda b, t: (0, 0)),
                pl.BlockSpec((C, HIDDEN), lambda b, t: (0, 0)),
                pl.BlockSpec((1, C), lambda b, t: (0, 0)),
            ],
            out_specs=pl.BlockSpec((1, block_b, 2 * C), lambda b, t: (b, 0, 0)),
            scratch_shapes=[
                pltpu.VMEM((block_b, 1, C), jnp.float32),   # running max
                pltpu.VMEM((block_b, 1, C), jnp.float32),   # sum e
                pltpu.VMEM((block_b, 1, C), jnp.float32),   # sum x*e
                pltpu.VMEM((block_b, 1, C), jnp.float32),   # sum x^2*e
            ],
        ),
        compiler_params=pltpu.CompilerParams(
            dimension_semantics=("parallel", "arbitrary"),
            vmem_limit_bytes=int(vmem_budget),
        ),
        cost_estimate=cost,
    )(x, w1.astype(compute_dtype), b1_2d, w2.astype(compute_dtype), b2_2d)
    return out3d.reshape(B, 2 * C)


def asp_reference(x, w1, b1, w2, b2):
    """Pure-JAX f32 reference for correctness checking."""
    x = x.astype(jnp.float32)
    h = jnp.einsum('hc,bct->bht', w1, x) + b1[None, :, None]
    h = jnp.maximum(h, 0.0)
    logits = jnp.einsum('ch,bht->bct', w2, h) + b2[None, :, None]
    w = jax.nn.softmax(logits, axis=2)
    mean = jnp.sum(x * w, axis=2)
    std = jnp.sqrt(jnp.clip(jnp.sum(x * x * w, axis=2) - mean ** 2, 1e-5))
    return jnp.concatenate([mean, std], axis=1)


if __name__ == "__main__":
    key = jax.random.PRNGKey(0)
    kx, k1, k2, k3, k4, kx2, k5, k6, k7, k8 = jax.random.split(key, 10)

    # --- Config 1: B=4, C=16, T=32 (single T tile, batch grid of 2) ---------
    B, C, T = 4, 16, 32
    x = jax.random.normal(kx, (B, C, T), dtype=jnp.float32)
    w1 = jax.random.normal(k1, (HIDDEN, C), dtype=jnp.float32) * 0.1
    b1 = jax.random.normal(k2, (HIDDEN,), dtype=jnp.float32) * 0.1
    w2 = jax.random.normal(k3, (C, HIDDEN), dtype=jnp.float32) * 0.1
    b2 = jax.random.normal(k4, (C,), dtype=jnp.float32) * 0.1
    ref = asp_reference(x, w1, b1, w2, b2)

    # Exact-precision path (f32 everywhere) -> tight tolerance.
    out_f32 = jax.block_until_ready(
        asp_forward(x, w1, b1, w2, b2, compute_dtype=jnp.float32))
    assert out_f32.shape == (B, 2 * C), out_f32.shape
    assert jnp.allclose(out_f32, ref, atol=1e-4, rtol=1e-4), (
        float(jnp.max(jnp.abs(out_f32 - ref))))

    # Default fast path: bf16 x streamed natively, bf16 MXU, f32 statistics.
    x_bf16 = x.astype(jnp.bfloat16)
    out_bf16 = jax.block_until_ready(asp_forward(x_bf16, w1, b1, w2, b2))
    assert out_bf16.shape == (B, 2 * C), out_bf16.shape
    assert jnp.allclose(out_bf16.astype(jnp.float32), ref, atol=8e-2, rtol=8e-2), (
        float(jnp.max(jnp.abs(out_bf16.astype(jnp.float32) - ref))))

    # --- Config 2: T-tiled online softmax with a ragged last tile -----------
    B2, C2, T2 = 2, 8, 160
    x2 = jax.random.normal(kx2, (B2, C2, T2), dtype=jnp.float32)
    w1b = jax.random.normal(k5, (HIDDEN, C2), dtype=jnp.float32) * 0.1
    b1b = jax.random.normal(k6, (HIDDEN,), dtype=jnp.float32) * 0.1
    w2b = jax.random.normal(k7, (C2, HIDDEN), dtype=jnp.float32) * 0.1
    b2b = jax.random.normal(k8, (C2,), dtype=jnp.float32) * 0.1
    ref2 = asp_reference(x2, w1b, b1b, w2b, b2b)

    out2 = jax.block_until_ready(
        asp_forward(x2, w1b, b1b, w2b, b2b,
                    compute_dtype=jnp.float32, block_t=128))  # grid_t=2, ragged
    assert out2.shape == (B2, 2 * C2), out2.shape
    assert jnp.allclose(out2, ref2, atol=1e-4, rtol=1e-4), (
        float(jnp.max(jnp.abs(out2 - ref2))))

    print("KERNEL_OK")
</pallas_src>

<mosaic_0001>
module attributes {stable_mosaic.version = 11 : i64} {
  func.func @_asp_kernel(%arg0: i32, %arg1: i32, %arg2: memref<2x16x32xf32, #tpu.memory_space<vmem>>, %arg3: memref<128x16xf32, #tpu.memory_space<vmem>>, %arg4: memref<1x128xf32, #tpu.memory_space<vmem>>, %arg5: memref<16x128xf32, #tpu.memory_space<vmem>>, %arg6: memref<1x16xf32, #tpu.memory_space<vmem>>, %arg7: memref<1x2x32xf32, #tpu.memory_space<vmem>>, %arg8: memref<2x1x16xf32, #tpu.memory_space<vmem>>, %arg9: memref<2x1x16xf32, #tpu.memory_space<vmem>>, %arg10: memref<2x1x16xf32, #tpu.memory_space<vmem>>, %arg11: memref<2x1x16xf32, #tpu.memory_space<vmem>>) attributes {dimension_semantics = [#tpu.dimension_semantics<parallel>, #tpu.dimension_semantics<arbitrary>], iteration_bounds = array<i64: 2, 1>, scalar_prefetch = 0 : i64, scratch_operands = 4 : i64, tpu.core_type = #tpu.core_type<tc>, window_params = [{transform_indices = @transform_0, window_bounds = array<i64: 2, 16, 32>}, {pipeline_mode = #tpu.pipeline_mode<synchronous>, transform_indices = @transform_1, window_bounds = array<i64: 128, 16>}, {pipeline_mode = #tpu.pipeline_mode<synchronous>, transform_indices = @transform_2, window_bounds = array<i64: 1, 128>}, {pipeline_mode = #tpu.pipeline_mode<synchronous>, transform_indices = @transform_3, window_bounds = array<i64: 16, 128>}, {pipeline_mode = #tpu.pipeline_mode<synchronous>, transform_indices = @transform_4, window_bounds = array<i64: 1, 16>}, {transform_indices = @transform_5, window_bounds = array<i64: 1, 2, 32>}]} {
    %c0_i32 = arith.constant 0 : i32
    %0 = arith.cmpi eq, %arg1, %c0_i32 : i32
    %1 = arith.extui %0 : i1 to i32
    %c0_i32_0 = arith.constant 0 : i32
    %2 = arith.cmpi ne, %1, %c0_i32_0 : i32
    scf.if %2 {
      %cst = arith.constant 0xFF800000 : f32
      %13 = vector.broadcast %cst : f32 to vector<2x1x16xf32>
      %c0_12 = arith.constant 0 : index
      %c0_13 = arith.constant 0 : index
      %c0_14 = arith.constant 0 : index
      %14 = vector.load %arg8[%c0_12, %c0_13, %c0_14] : memref<2x1x16xf32, #tpu.memory_space<vmem>>, vector<2x1x16xf32>
      tpu.vector_store %arg8[%c0_12, %c0_13, %c0_14], %13 {strides = array<i32>} : memref<2x1x16xf32, #tpu.memory_space<vmem>>, vector<2x1x16xf32>,
      %cst_15 = arith.constant 0.000000e+00 : f32
      %15 = vector.broadcast %cst_15 : f32 to vector<2x1x16xf32>
      %c0_16 = arith.constant 0 : index
      %c0_17 = arith.constant 0 : index
      %c0_18 = arith.constant 0 : index
      %16 = vector.load %arg9[%c0_16, %c0_17, %c0_18] : memref<2x1x16xf32, #tpu.memory_space<vmem>>, vector<2x1x16xf32>
      tpu.vector_store %arg9[%c0_16, %c0_17, %c0_18], %15 {strides = array<i32>} : memref<2x1x16xf32, #tpu.memory_space<vmem>>, vector<2x1x16xf32>,
      %cst_19 = arith.constant 0.000000e+00 : f32
      %17 = vector.broadcast %cst_19 : f32 to vector<2x1x16xf32>
      %c0_20 = arith.constant 0 : index
      %c0_21 = arith.constant 0 : index
      %c0_22 = arith.constant 0 : index
      %18 = vector.load %arg10[%c0_20, %c0_21, %c0_22] : memref<2x1x16xf32, #tpu.memory_space<vmem>>, vector<2x1x16xf32>
      tpu.vector_store %arg10[%c0_20, %c0_21, %c0_22], %17 {strides = array<i32>} : memref<2x1x16xf32, #tpu.memory_space<vmem>>, vector<2x1x16xf32>,
      %cst_23 = arith.constant 0.000000e+00 : f32
      %19 = vector.broadcast %cst_23 : f32 to vector<2x1x16xf32>
      %c0_24 = arith.constant 0 : index
      %c0_25 = arith.constant 0 : index
      %c0_26 = arith.constant 0 : index
      %20 = vector.load %arg11[%c0_24, %c0_25, %c0_26] : memref<2x1x16xf32, #tpu.memory_space<vmem>>, vector<2x1x16xf32>
      tpu.vector_store %arg11[%c0_24, %c0_25, %c0_26], %19 {strides = array<i32>} : memref<2x1x16xf32, #tpu.memory_space<vmem>>, vector<2x1x16xf32>,
    } else {
    }
    %c0 = arith.constant 0 : index
    %c0_1 = arith.constant 0 : index
    %3 = vector.load %arg3[%c0, %c0_1] : memref<128x16xf32, #tpu.memory_space<vmem>>, vector<128x16xf32>
    %c0_2 = arith.constant 0 : index
    %c0_3 = arith.constant 0 : index
    %4 = vector.load %arg5[%c0_2, %c0_3] : memref<16x128xf32, #tpu.memory_space<vmem>>, vector<16x128xf32>
    %c0_4 = arith.constant 0 : index
    %c0_5 = arith.constant 0 : index
    %5 = vector.load %arg4[%c0_4, %c0_5] : memref<1x128xf32, #tpu.memory_space<vmem>>, vector<1x128xf32>
    %6 = vector.shape_cast %5 : vector<1x128xf32> to vector<128x1xf32>
    %c0_6 = arith.constant 0 : index
    %c0_7 = arith.constant 0 : index
    %7 = vector.load %arg6[%c0_6, %c0_7] : memref<1x16xf32, #tpu.memory_space<vmem>>, vector<1x16xf32>
    %8 = vector.shape_cast %7 : vector<1x16xf32> to vector<16x1xf32>
    %c0_i32_8 = arith.constant 0 : i32
    %c2_i32 = arith.constant 2 : i32
    %9 = arith.addi %c0_i32_8, %c2_i32 : i32
    %c1_i32 = arith.constant 1 : i32
    scf.for %arg12 = %c0_i32_8 to %9 step %c1_i32  : i32 {
      %c1_i32_12 = arith.constant 1 : i32
      %13 = arith.muli %arg12, %c1_i32_12 : i32
      %c0_i32_13 = arith.constant 0 : i32
      %14 = arith.addi %c0_i32_13, %13 : i32
      %15 = arith.index_cast %14 : i32 to index
      %c0_14 = arith.constant 0 : index
      %c0_15 = arith.constant 0 : index
      %16 = vector.load %arg2[%15, %c0_14, %c0_15] : memref<2x16x32xf32, #tpu.memory_space<vmem>>, vector<1x16x32xf32>
      %17 = vector.shape_cast %16 : vector<1x16x32xf32> to vector<16x32xf32>
      %cst = arith.constant dense<0.000000e+00> : vector<128x32xf32>
      %18 = tpu.matmul %3, %17, %cst {dimension_numbers = #tpu.dot_dimension_numbers<[1], [0], [0], [1], [0, 0, 1, 1], [], []>} : vector<128x16xf32>, vector<16x32xf32>, vector<128x32xf32> -> vector<128x32xf32>
      %19 = vector.broadcast %6 : vector<128x1xf32> to vector<128x32xf32>
      %20 = arith.addf %18, %19 : vector<128x32xf32>
      %cst_16 = arith.constant 0.000000e+00 : f32
      %21 = vector.broadcast %cst_16 : f32 to vector<128x32xf32>
      %22 = arith.maximumf %20, %21 : vector<128x32xf32>
      %cst_17 = arith.constant dense<0.000000e+00> : vector<16x32xf32>
      %23 = tpu.matmul %4, %22, %cst_17 {dimension_numbers = #tpu.dot_dimension_numbers<[1], [0], [0], [1], [0, 0, 1, 1], [], []>} : vector<16x128xf32>, vector<128x32xf32>, vector<16x32xf32> -> vector<16x32xf32>
      %24 = vector.broadcast %8 : vector<16x1xf32> to vector<16x32xf32>
      %25 = arith.addf %23, %24 : vector<16x32xf32>
      %cst_18 = arith.constant dense<0xFF800000> : vector<16xf32>
      %26 = vector.multi_reduction <maximumf>, %25, %cst_18 [1] : vector<16x32xf32> to vector<16xf32>
      %27 = vector.shape_cast %26 : vector<16xf32> to vector<16x1xf32>
      %28 = vector.broadcast %27 : vector<16x1xf32> to vector<16x32xf32>
      %29 = arith.subf %25, %28 : vector<16x32xf32>
      %30 = math.exp %29 : vector<16x32xf32>
      %31 = arith.mulf %17, %30 : vector<16x32xf32>
      %cst_19 = arith.constant dense<0.000000e+00> : vector<16xf32>
      %32 = vector.multi_reduction <add>, %30, %cst_19 [1] : vector<16x32xf32> to vector<16xf32>
      %33 = vector.shape_cast %32 : vector<16xf32> to vector<16x1xf32>
      %34 = vector.shape_cast %33 : vector<16x1xf32> to vector<1x16xf32>
      %cst_20 = arith.constant dense<0.000000e+00> : vector<16xf32>
      %35 = vector.multi_reduction <add>, %31, %cst_20 [1] : vector<16x32xf32> to vector<16xf32>
      %36 = vector.shape_cast %35 : vector<16xf32> to vector<16x1xf32>
      %37 = vector.shape_cast %36 : vector<16x1xf32> to vector<1x16xf32>
      %38 = arith.mulf %31, %17 : vector<16x32xf32>
      %cst_21 = arith.constant dense<0.000000e+00> : vector<16xf32>
      %39 = vector.multi_reduction <add>, %38, %cst_21 [1] : vector<16x32xf32> to vector<16xf32>
      %40 = vector.shape_cast %39 : vector<16xf32> to vector<16x1xf32>
      %41 = vector.shape_cast %40 : vector<16x1xf32> to vector<1x16xf32>
      %42 = vector.shape_cast %27 : vector<16x1xf32> to vector<1x16xf32>
      %43 = arith.index_cast %14 : i32 to index
      %c0_22 = arith.constant 0 : index
      %c0_23 = arith.constant 0 : index
      %44 = vector.load %arg8[%43, %c0_22, %c0_23] : memref<2x1x16xf32, #tpu.memory_space<vmem>>, vector<1x1x16xf32>
      %45 = vector.shape_cast %44 : vector<1x1x16xf32> to vector<1x16xf32>
      %46 = arith.maximumf %45, %42 : vector<1x16xf32>
      %47 = arith.subf %45, %46 : vector<1x16xf32>
      %48 = math.exp %47 : vector<1x16xf32>
      %49 = arith.subf %42, %46 : vector<1x16xf32>
      %50 = math.exp %49 : vector<1x16xf32>
      %51 = arith.index_cast %14 : i32 to index
      %c0_24 = arith.constant 0 : index
      %c0_25 = arith.constant 0 : index
      %52 = vector.load %arg9[%51, %c0_24, %c0_25] : memref<2x1x16xf32, #tpu.memory_space<vmem>>, vector<1x1x16xf32>
      %53 = vector.shape_cast %52 : vector<1x1x16xf32> to vector<1x16xf32>
      %54 = arith.mulf %53, %48 : vector<1x16xf32>
      %55 = arith.mulf %34, %50 : vector<1x16xf32>
      %56 = arith.addf %54, %55 : vector<1x16xf32>
      %57 = arith.index_cast %14 : i32 to index
      %c0_26 = arith.constant 0 : index
      %c0_27 = arith.constant 0 : index
      %58 = vector.load %arg9[%57, %c0_26, %c0_27] : memref<2x1x16xf32, #tpu.memory_space<vmem>>, vector<1x1x16xf32>
      %59 = vector.shape_cast %58 : vector<1x1x16xf32> to vector<1x16xf32>
      %60 = vector.shape_cast %56 : vector<1x16xf32> to vector<1x1x16xf32>
      tpu.vector_store %arg9[%57, %c0_26, %c0_27], %60 {strides = array<i32>} : memref<2x1x16xf32, #tpu.memory_space<vmem>>, vector<1x1x16xf32>,
      %61 = arith.index_cast %14 : i32 to index
      %c0_28 = arith.constant 0 : index
      %c0_29 = arith.constant 0 : index
      %62 = vector.load %arg10[%61, %c0_28, %c0_29] : memref<2x1x16xf32, #tpu.memory_space<vmem>>, vector<1x1x16xf32>
      %63 = vector.shape_cast %62 : vector<1x1x16xf32> to vector<1x16xf32>
      %64 = arith.mulf %63, %48 : vector<1x16xf32>
      %65 = arith.mulf %37, %50 : vector<1x16xf32>
      %66 = arith.addf %64, %65 : vector<1x16xf32>
      %67 = arith.index_cast %14 : i32 to index
      %c0_30 = arith.constant 0 : index
      %c0_31 = arith.constant 0 : index
      %68 = vector.load %arg10[%67, %c0_30, %c0_31] : memref<2x1x16xf32, #tpu.memory_space<vmem>>, vector<1x1x16xf32>
      %69 = vector.shape_cast %68 : vector<1x1x16xf32> to vector<1x16xf32>
      %70 = vector.shape_cast %66 : vector<1x16xf32> to vector<1x1x16xf32>
      tpu.vector_store %arg10[%67, %c0_30, %c0_31], %70 {strides = array<i32>} : memref<2x1x16xf32, #tpu.memory_space<vmem>>, vector<1x1x16xf32>,
      %71 = arith.index_cast %14 : i32 to index
      %c0_32 = arith.constant 0 : index
      %c0_33 = arith.constant 0 : index
      %72 = vector.load %arg11[%71, %c0_32, %c0_33] : memref<2x1x16xf32, #tpu.memory_space<vmem>>, vector<1x1x16xf32>
      %73 = vector.shape_cast %72 : vector<1x1x16xf32> to vector<1x16xf32>
      %74 = arith.mulf %73, %48 : vector<1x16xf32>
      %75 = arith.mulf %41, %50 : vector<1x16xf32>
      %76 = arith.addf %74, %75 : vector<1x16xf32>
      %77 = arith.index_cast %14 : i32 to index
      %c0_34 = arith.constant 0 : index
      %c0_35 = arith.constant 0 : index
      %78 = vector.load %arg11[%77, %c0_34, %c0_35] : memref<2x1x16xf32, #tpu.memory_space<vmem>>, vector<1x1x16xf32>
      %79 = vector.shape_cast %78 : vector<1x1x16xf32> to vector<1x16xf32>
      %80 = vector.shape_cast %76 : vector<1x16xf32> to vector<1x1x16xf32>
      tpu.vector_store %arg11[%77, %c0_34, %c0_35], %80 {strides = array<i32>} : memref<2x1x16xf32, #tpu.memory_space<vmem>>, vector<1x1x16xf32>,
      %81 = arith.index_cast %14 : i32 to index
      %c0_36 = arith.constant 0 : index
      %c0_37 = arith.constant 0 : index
      %82 = vector.load %arg8[%81, %c0_36, %c0_37] : memref<2x1x16xf32, #tpu.memory_space<vmem>>, vector<1x1x16xf32>
      %83 = vector.shape_cast %82 : vector<1x1x16xf32> to vector<1x16xf32>
      %84 = vector.shape_cast %46 : vector<1x16xf32> to vector<1x1x16xf32>
      tpu.vector_store %arg8[%81, %c0_36, %c0_37], %84 {strides = array<i32>} : memref<2x1x16xf32, #tpu.memory_space<vmem>>, vector<1x1x16xf32>,
    }
    %c2_i32_9 = arith.constant 2 : i32
    %c0_i32_10 = arith.constant 0 : i32
    %10 = arith.cmpi eq, %arg1, %c0_i32_10 : i32
    %11 = arith.extui %10 : i1 to i32
    %c0_i32_11 = arith.constant 0 : i32
    %12 = arith.cmpi ne, %11, %c0_i32_11 : i32
    scf.if %12 {
      %c0_12 = arith.constant 0 : index
      %c0_13 = arith.constant 0 : index
      %c0_14 = arith.constant 0 : index
      %13 = vector.load %arg9[%c0_12, %c0_13, %c0_14] : memref<2x1x16xf32, #tpu.memory_space<vmem>>, vector<2x1x16xf32>
      %14 = vector.shape_cast %13 : vector<2x1x16xf32> to vector<2x16xf32>
      %c0_15 = arith.constant 0 : index
      %c0_16 = arith.constant 0 : index
      %c0_17 = arith.constant 0 : index
      %15 = vector.load %arg10[%c0_15, %c0_16, %c0_17] : memref<2x1x16xf32, #tpu.memory_space<vmem>>, vector<2x1x16xf32>
      %16 = vector.shape_cast %15 : vector<2x1x16xf32> to vector<2x16xf32>
      %c0_18 = arith.constant 0 : index
      %c0_19 = arith.constant 0 : index
      %c0_20 = arith.constant 0 : index
      %17 = vector.load %arg11[%c0_18, %c0_19, %c0_20] : memref<2x1x16xf32, #tpu.memory_space<vmem>>, vector<2x1x16xf32>
      %18 = vector.shape_cast %17 : vector<2x1x16xf32> to vector<2x16xf32>
      %19 = tpu.reciprocal %14 : vector<2x16xf32> -> vector<2x16xf32>
      %20 = arith.mulf %16, %19 : vector<2x16xf32>
      %21 = arith.mulf %18, %19 : vector<2x16xf32>
      %22 = arith.mulf %20, %20 : vector<2x16xf32>
      %23 = arith.subf %21, %22 : vector<2x16xf32>
      %cst = arith.constant 9.99999974E-6 : f32
      %24 = vector.broadcast %cst : f32 to vector<2x16xf32>
      %25 = arith.maximumf %23, %24 : vector<2x16xf32>
      %26 = math.sqrt %25 : vector<2x16xf32>
      %27 = tpu.concatenate %20, %26 in 1 : vector<2x16xf32>, vector<2x16xf32> -> vector<2x32xf32>
      %28 = vector.shape_cast %27 : vector<2x32xf32> to vector<1x2x32xf32>
      %c0_21 = arith.constant 0 : index
      %c0_22 = arith.constant 0 : index
      %c0_23 = arith.constant 0 : index
      %29 = vector.load %arg7[%c0_21, %c0_22, %c0_23] : memref<1x2x32xf32, #tpu.memory_space<vmem>>, vector<1x2x32xf32>
      tpu.vector_store %arg7[%c0_21, %c0_22, %c0_23], %28 {strides = array<i32>} : memref<1x2x32xf32, #tpu.memory_space<vmem>>, vector<1x2x32xf32>,
    } else {
    }
    return
  }
  func.func @transform_0(%arg0: i32, %arg1: i32) -> (i32, i32, i32) {
    %c0_i32 = arith.constant 0 : i32
    %c0_i32_0 = arith.constant 0 : i32
    return %arg0, %c0_i32, %arg1 : i32, i32, i32
  }
  func.func @transform_1(%arg0: i32, %arg1: i32) -> (i32, i32) {
    %c0_i32 = arith.constant 0 : i32
    %c0_i32_0 = arith.constant 0 : i32
    %c0_i32_1 = arith.constant 0 : i32
    return %c0_i32, %c0_i32_0 : i32, i32
  }
  func.func @transform_2(%arg0: i32, %arg1: i32) -> (i32, i32) {
    %c0_i32 = arith.constant 0 : i32
    %c0_i32_0 = arith.constant 0 : i32
    %c0_i32_1 = arith.constant 0 : i32
    return %c0_i32, %c0_i32_0 : i32, i32
  }
  func.func @transform_3(%arg0: i32, %arg1: i32) -> (i32, i32) {
    %c0_i32 = arith.constant 0 : i32
    %c0_i32_0 = arith.constant 0 : i32
    %c0_i32_1 = arith.constant 0 : i32
    return %c0_i32, %c0_i32_0 : i32, i32
  }
  func.func @transform_4(%arg0: i32, %arg1: i32) -> (i32, i32) {
    %c0_i32 = arith.constant 0 : i32
    %c0_i32_0 = arith.constant 0 : i32
    %c0_i32_1 = arith.constant 0 : i32
    return %c0_i32, %c0_i32_0 : i32, i32
  }
  func.func @transform_5(%arg0: i32, %arg1: i32) -> (i32, i32, i32) {
    %c0_i32 = arith.constant 0 : i32
    %c0_i32_0 = arith.constant 0 : i32
    %c0_i32_1 = arith.constant 0 : i32
    return %arg0, %c0_i32, %c0_i32_0 : i32, i32, i32
  }
}

</mosaic_0001>

<llo_original>
// kernel: tpu_custom_call.1
$region0: #{tpu_custom_call.1}
  #allocation0 [shape = 'u32[]', space=smem, size = 0x4, offset = 0x4, fixed_abs, tag = 'smem constant byte address 0x4 - core index']
  #allocation1 [shape = 'u32[72,128]{1,0:T(1,128)}', space=vmem, size = 0x9000, scoped, tag = 'internal scratch']
  #allocation2 [shape = 'f32[2,1,16]{2,1,0:T(1,128)}', space=vmem, size = 0x400, scoped, tag = 'scratch operand']
  #allocation3 [shape = 'f32[2,1,16]{2,1,0:T(1,128)}', space=vmem, size = 0x400, scoped, tag = 'scratch operand']
  #allocation4 [shape = 'f32[2,1,16]{2,1,0:T(1,128)}', space=vmem, size = 0x400, scoped, tag = 'scratch operand']
  #allocation5 [shape = 'f32[2,1,16]{2,1,0:T(1,128)}', space=vmem, size = 0x400, scoped, tag = 'scratch operand']
  %s0 = inlined_call_operand.vmem [shape: f32[4,16,32], index: 0, kind: input, shape index: {}]
  %s1 = inlined_call_operand.vmem [shape: f32[128,16], index: 1, kind: input, shape index: {}]
  %s2 = inlined_call_operand.vmem [shape: f32[1,128], index: 2, kind: input, shape index: {}]
  %s3 = inlined_call_operand.vmem [shape: f32[16,128], index: 3, kind: input, shape index: {}]
  %s4 = inlined_call_operand.vmem [shape: f32[1,16], index: 4, kind: input, shape index: {}]
  %s5 = inlined_call_operand.hbm [shape: f32[2,2,32], index: 5, kind: output, shape index: {}]
  %s6 = sld [smem:[#allocation0]]
  $region68: #{tpu_custom_call.1} parent=0
    _
  %s8 = ssub.s32 1, %s6
  %s9 = scalar_select 0, %s8, %s6
  $region1: #{tpu_custom_call.1} parent=0
    #allocation6 [shape = 'u8[2048]{0}', space=vmem, size = 0x800, scoped, tag = 'output window, operand 0']
    #allocation7 [shape = 's32[2]{0}', space=sflag, size = 0x8, scoped, tag = 'scoped memory for tpu_custom_call.1']
    %10 = vsyncpa [#allocation7], 0
    %s11 = scalar_lea.sflag [#allocation7], 1
    %12 = vsyncpa %s11, 0
    loop: start=0, step=1, limit=4
    $region2: #{tpu_custom_call.1} parent=1 // loop_pre_header
      _
    $region3: #{tpu_custom_call.1} parent=1 // loop_header
      %s14 = sphi 0, %s18
      %p15 = scmp.ge.s32.totalorder %s14, 4
      %s21 = sphi 0, %s33
      %s22 = sphi 0, %s29
      %s23 = sphi 0, %s21
      %s24 = sphi 0, %s22
      %s25 = sphi 0, %s23
      %s26 = sphi 0, %s24
      %s38 = sphi 0, %s40
      %s41 = sphi 0, %s38
      %s42 = sphi 0, %s41
      %s58 = sphi 0, %s42
      %s62 = sphi 0, %s62
      %s64 = sphi 0, %s62
      %s65 = sphi 0, %s64
      %s79 = sphi 0, %s65
      %s83 = sphi 0, %s83
      %s85 = sphi 0, %s83
      %s86 = sphi 0, %s85
      %s100 = sphi 0, %s86
      %s104 = sphi 0, %s104
      %s106 = sphi 0, %s104
      %s107 = sphi 0, %s106
      %s121 = sphi 0, %s107
      %s125 = sphi 0, %s125
      %s127 = sphi 0, %s125
      %s128 = sphi 0, %s127
      %s142 = sphi 0, %s128
      %s148 = sphi 0, %s150
      %s151 = sphi 0, %s148
      %s152 = sphi 0, %s151
      %s168 = sphi 0, %s152
    $region4: #{tpu_custom_call.1} parent=1 // loop_header_branch
      %17 = sbr.rel (%p15) target = $region8
    $region5: #{tpu_custom_call.1} parent=1 // loop_body
      %s19 = ssub.s32 %s14, 1
      %s20 = ssub.s32 %s14, 2
      %s27 = sadd.s32 1, %s22
      %p28 = scmp.ge.s32.totalorder %s27, 1
      %s29 = scalar_select %p28, 0, %s27
      %s30 = sadd.s32 1, %s21
      %s31 = scalar_select %p28, %s30, %s21
      %p32 = scmp.ge.s32.totalorder %s31, 2
      %s33 = scalar_select %p32, 0, %s31
      %s34 = ssub.s32 %s21, %s33
      %s35 = ssub.s32 %s22, %s29
      %s36 = sor.u32 %s34, %s35
      %p37 = scmp.eq.s32.totalorder %s36, 0
      %s39 = sadd.s32 %s38, 1
      %s40 = scalar_select %p37, %s38, %s39
      %p43 = pneg %p37
      %p44 = scmp.eq.s32.totalorder %s14, 1
      %p45 = por %p43, %p44
      %p46 = scmp.ne.s32.totalorder %s38, %s41
      %p47 = scmp.eq.s32.totalorder %s14, 0
      %p48 = por %p46, %p47
      %p49 = scmp.ne.s32.totalorder %s38, %s41
      %p50 = scmp.eq.s32.totalorder %s19, 1
      %p51 = por %p49, %p50
      %p52 = scmp.ne.s32.totalorder %s41, %s42
      %p53 = scmp.eq.s32.totalorder %s19, 0
      %p54 = por %p52, %p53
      %p55 = scmp.ne.s32.totalorder %s41, %s42
      %p56 = scmp.eq.s32.totalorder %s20, 1
      %p57 = por %p55, %p56
      %p59 = scmp.ne.s32.totalorder %s42, %s58
      %p60 = scmp.eq.s32.totalorder %s20, 0
      %p61 = por %p59, %p60
      %s63 = sadd.s32 %s62, 1
      %p66 = scmp.eq.s32.totalorder %s14, 1
      %p67 = scmp.ne.s32.totalorder %s62, %s64
      %p68 = scmp.eq.s32.totalorder %s14, 0
      %p69 = por %p67, %p68
      %p70 = scmp.ne.s32.totalorder %s62, %s64
      %p71 = scmp.eq.s32.totalorder %s19, 1
      %p72 = por %p70, %p71
      %p73 = scmp.ne.s32.totalorder %s64, %s65
      %p74 = scmp.eq.s32.totalorder %s19, 0
      %p75 = por %p73, %p74
      %p76 = scmp.ne.s32.totalorder %s64, %s65
      %p77 = scmp.eq.s32.totalorder %s20, 1
      %p78 = por %p76, %p77
      %p80 = scmp.ne.s32.totalorder %s65, %s79
      %p81 = scmp.eq.s32.totalorder %s20, 0
      %p82 = por %p80, %p81
      %s84 = sadd.s32 %s83, 1
      %p87 = scmp.eq.s32.totalorder %s14, 1
      %p88 = scmp.ne.s32.totalorder %s83, %s85
      %p89 = scmp.eq.s32.totalorder %s14, 0
      %p90 = por %p88, %p89
      %p91 = scmp.ne.s32.totalorder %s83, %s85
      %p92 = scmp.eq.s32.totalorder %s19, 1
      %p93 = por %p91, %p92
      %p94 = scmp.ne.s32.totalorder %s85, %s86
      %p95 = scmp.eq.s32.totalorder %s19, 0
      %p96 = por %p94, %p95
      %p97 = scmp.ne.s32.totalorder %s85, %s86
      %p98 = scmp.eq.s32.totalorder %s20, 1
      %p99 = por %p97, %p98
      %p101 = scmp.ne.s32.totalorder %s86, %s100
      %p102 = scmp.eq.s32.totalorder %s20, 0
      %p103 = por %p101, %p102
      %s105 = sadd.s32 %s104, 1
      %p108 = scmp.eq.s32.totalorder %s14, 1
      %p109 = scmp.ne.s32.totalorder %s104, %s106
      %p110 = scmp.eq.s32.totalorder %s14, 0
      %p111 = por %p109, %p110
      %p112 = scmp.ne.s32.totalorder %s104, %s106
      %p113 = scmp.eq.s32.totalorder %s19, 1
      %p114 = por %p112, %p113
      %p115 = scmp.ne.s32.totalorder %s106, %s107
      %p116 = scmp.eq.s32.totalorder %s19, 0
      %p117 = por %p115, %p116
      %p118 = scmp.ne.s32.totalorder %s106, %s107
      %p119 = scmp.eq.s32.totalorder %s20, 1
      %p120 = por %p118, %p119
      %p122 = scmp.ne.s32.totalorder %s107, %s121
      %p123 = scmp.eq.s32.totalorder %s20, 0
      %p124 = por %p122, %p123
      %s126 = sadd.s32 %s125, 1
      %p129 = scmp.eq.s32.totalorder %s14, 1
      %p130 = scmp.ne.s32.totalorder %s125, %s127
      %p131 = scmp.eq.s32.totalorder %s14, 0
      %p132 = por %p130, %p131
      %p133 = scmp.ne.s32.totalorder %s125, %s127
      %p134 = scmp.eq.s32.totalorder %s19, 1
      %p135 = por %p133, %p134
      %p136 = scmp.ne.s32.totalorder %s127, %s128
      %p137 = scmp.eq.s32.totalorder %s19, 0
      %p138 = por %p136, %p137
      %p139 = scmp.ne.s32.totalorder %s127, %s128
      %p140 = scmp.eq.s32.totalorder %s20, 1
      %p141 = por %p139, %p140
      %p143 = scmp.ne.s32.totalorder %s128, %s142
      %p144 = scmp.eq.s32.totalorder %s20, 0
      %p145 = por %p143, %p144
      %s146 = ssub.s32 %s21, %s33
      %p147 = scmp.eq.s32.totalorder %s146, 0
      %s149 = sadd.s32 %s148, 1
      %s150 = scalar_select %p147, %s148, %s149
      %p153 = pneg %p147
      %p154 = scmp.eq.s32.totalorder %s14, 1
      %p155 = por %p153, %p154
      %p156 = scmp.ne.s32.totalorder %s148, %s151
      %p157 = scmp.eq.s32.totalorder %s14, 0
      %p158 = por %p156, %p157
      %p159 = scmp.ne.s32.totalorder %s148, %s151
      %p160 = scmp.eq.s32.totalorder %s19, 1
      %p161 = por %p159, %p160
      %p162 = scmp.ne.s32.totalorder %s151, %s152
      %p163 = scmp.eq.s32.totalorder %s19, 0
      %p164 = por %p162, %p163
      %p165 = scmp.ne.s32.totalorder %s151, %s152
      %p166 = scmp.eq.s32.totalorder %s20, 1
      %p167 = por %p165, %p166
      %p169 = scmp.ne.s32.totalorder %s152, %s168
      %p170 = scmp.eq.s32.totalorder %s20, 0
      %p171 = por %p169, %p170
      %p172 = scmp.le.s32.totalorder 1, %s14
      %p173 = scmp.lt.s32.totalorder %s14, 3
      %p174 = pnand %p172, %p173
      %p175 = pneg %p174
      // Predicated region
      $region9: #{tpu_custom_call.1} parent=5 // pred_check
        _
      $region10: #{tpu_custom_call.1} parent=5 // pred_check_branch
        %177 = sbr.rel (%p174) target = $region12
      $region11: #{tpu_custom_call.1} parent=5 // pred_region
        %s178 = ssub.s32 %s14, 1
        // Predicated region
        $region13: #{tpu_custom_call.1} parent=11 // pred_check
          %p179 = pneg %p75
        $region14: #{tpu_custom_call.1} parent=11 // pred_check_branch
          %181 = sbr.rel (%p179) target = $region16
        $region15: #{tpu_custom_call.1} parent=11 // pred_region
          _
        $region16: #{tpu_custom_call.1} parent=11 // pred_fallthru
          _
        // Predicated region
        $region17: #{tpu_custom_call.1} parent=11 // pred_check
          %p182 = pneg %p96
        $region18: #{tpu_custom_call.1} parent=11 // pred_check_branch
          %184 = sbr.rel (%p182) target = $region20
        $region19: #{tpu_custom_call.1} parent=11 // pred_region
          _
        $region20: #{tpu_custom_call.1} parent=11 // pred_fallthru
          _
        // Predicated region
        $region21: #{tpu_custom_call.1} parent=11 // pred_check
          %p185 = pneg %p117
        $region22: #{tpu_custom_call.1} parent=11 // pred_check_branch
          %187 = sbr.rel (%p185) target = $region24
        $region23: #{tpu_custom_call.1} parent=11 // pred_region
          _
        $region24: #{tpu_custom_call.1} parent=11 // pred_fallthru
          _
        // Predicated region
        $region25: #{tpu_custom_call.1} parent=11 // pred_check
          %p188 = pneg %p138
        $region26: #{tpu_custom_call.1} parent=11 // pred_check_branch
          %190 = sbr.rel (%p188) target = $region28
        $region27: #{tpu_custom_call.1} parent=11 // pred_region
          _
        $region28: #{tpu_custom_call.1} parent=11 // pred_fallthru
          _
      $region12: #{tpu_custom_call.1} parent=5 // pred_fallthru
        _
      %p191 = scmp.lt.s32.totalorder %s14, 2
      // Predicated region
      $region29: #{tpu_custom_call.1} parent=5 // pred_check
        %p192 = pneg %p191
      $region30: #{tpu_custom_call.1} parent=5 // pred_check_branch
        %194 = sbr.rel (%p192) target = $region32
      $region31: #{tpu_custom_call.1} parent=5 // pred_region
        // Predicated region
        $region33: #{tpu_custom_call.1} parent=31 // pred_check
          %p195 = pneg %p48
        $region34: #{tpu_custom_call.1} parent=31 // pred_check_branch
          %197 = sbr.rel (%p195) target = $region36
        $region35: #{tpu_custom_call.1} parent=31 // pred_region
          %s198 = smul.u32 2, %s21
          %p199 = scmp.lt.s32.totalorder %s198, 3
          %s200 = scalar_select %p199, %s198, 3
          %p201 = scmp.lt.s32.totalorder %s22, 0
          %s202 = scalar_select %p201, %s22, 0
          %s203 = smul.addr %s200, 2
          %s204 = sadd.s32 %s202, %s203
          %s205 = smul.addr %s204, 8
          %s206 = scalar_lea.vmem %s0, %s205
          %s207 = smul.u32 2, %s21
        $region36: #{tpu_custom_call.1} parent=31 // pred_fallthru
          _
      $region32: #{tpu_custom_call.1} parent=5 // pred_fallthru
        _
      %p208 = scmp.le.s32.totalorder 1, %s14
      %p209 = scmp.lt.s32.totalorder %s14, 3
      %p210 = pnand %p208, %p209
      %p211 = pneg %p210
      // Predicated region
      $region37: #{tpu_custom_call.1} parent=5 // pred_check
        _
      $region38: #{tpu_custom_call.1} parent=5 // pred_check_branch
        %213 = sbr.rel (%p210) target = $region40
      $region39: #{tpu_custom_call.1} parent=5 // pred_region
        %s214 = ssub.s32 %s14, 1
        %s215 = smul.u32 2, %s23
        %p216 = scmp.lt.s32.totalorder %s215, 3
        %s217 = scalar_select %p216, %s215, 3
        %p218 = scmp.lt.s32.totalorder %s24, 0
        %s219 = scalar_select %p218, %s24, 0
        %s220 = smul.addr %s217, 2
        %s221 = sadd.s32 %s219, %s220
        %s222 = smul.addr %s221, 8
        %s223 = scalar_lea.vmem %s0, %s222
        %p224 = pneg %p54
        %p225 = pneg %p51
        %p226 = pneg %p75
        %p227 = pneg %p72
        %p228 = pneg %p96
        %p229 = pneg %p93
        %p230 = pneg %p117
        %p231 = pneg %p114
        %p232 = pneg %p138
        %p233 = pneg %p135
        %p234 = pneg %p164
        %p235 = pneg %p161
        %s236 = sand.u32 %s151, 1
        %s237 = scalar_lea.sflag [#allocation7], %s236
        %s238 = sand.u32 %s151, 1
        %s239 = smul.addr %s238, 2
        %s240 = scalar_lea.vmem [#allocation6], %s239
        %s241 = smul.u32 2, %s23
        %p242 = scmp.lt.s32.totalorder %s241, 3
        %s243 = scalar_select %p242, %s241, 3
        %p244 = scmp.lt.s32.totalorder %s24, 0
        %s245 = scalar_select %p244, %s24, 0
        %s246 = smul.addr %s243, 2
        %s247 = sadd.s32 %s245, %s246
        %s248 = smul.addr %s247, 8
        %s249 = scalar_lea.vmem %s0, %s248
        %s250 = smul.u32 2, %s23
        %p251 = scmp.eq.s32.totalorder %s24, 0
        // Predicated region
        $region41: #{tpu_custom_call.1} parent=39 // pred_check
          %p252 = pneg %p251
        $region42: #{tpu_custom_call.1} parent=39 // pred_check_branch
          %254 = sbr.rel (%p252) target = $region44
        $region43: #{tpu_custom_call.1} parent=39 // pred_region
          %vm255 = vcmask 122880
          %256 = vst.msk [vmem:[#allocation2] sm:$0x1] %vm255, -inf
          %257 = vst.msk [vmem:[#allocation2 + $0x1] sm:$0x1] %vm255, -inf
          %258 = vst.msk [vmem:[#allocation3] sm:$0x1] %vm255, 0.0
          %259 = vst.msk [vmem:[#allocation3 + $0x1] sm:$0x1] %vm255, 0.0
          %260 = vst.msk [vmem:[#allocation4] sm:$0x1] %vm255, 0.0
          %261 = vst.msk [vmem:[#allocation4 + $0x1] sm:$0x1] %vm255, 0.0
          %262 = vst.msk [vmem:[#allocation5] sm:$0x1] %vm255, 0.0
          %263 = vst.msk [vmem:[#allocation5 + $0x1] sm:$0x1] %vm255, 0.0
        $region44: #{tpu_custom_call.1} parent=39 // pred_fallthru
          _
        %v264 = vld [vmem:[%s1] sm:$0xff]
        %v265 = vld [vmem:[%s1 + $0x8] sm:$0xff]
        %v266 = vld [vmem:[%s1 + $0x10] sm:$0xff]
        %v267 = vld [vmem:[%s1 + $0x18] sm:$0xff]
        %v268 = vld [vmem:[%s1 + $0x20] sm:$0xff]
        %v269 = vld [vmem:[%s1 + $0x28] sm:$0xff]
        %v270 = vld [vmem:[%s1 + $0x30] sm:$0xff]
        %v271 = vld [vmem:[%s1 + $0x38] sm:$0xff]
        %v272 = vld [vmem:[%s1 + $0x40] sm:$0xff]
        %v273 = vld [vmem:[%s1 + $0x48] sm:$0xff]
        %v274 = vld [vmem:[%s1 + $0x50] sm:$0xff]
        %v275 = vld [vmem:[%s1 + $0x58] sm:$0xff]
        %v276 = vld [vmem:[%s1 + $0x60] sm:$0xff]
        %v277 = vld [vmem:[%s1 + $0x68] sm:$0xff]
        %v278 = vld [vmem:[%s1 + $0x70] sm:$0xff]
        %v279 = vld [vmem:[%s1 + $0x78] sm:$0xff]
        %v280 = vld [vmem:[%s3] sm:$0xff]
        %v281 = vld [vmem:[%s3 + $0x8] sm:$0xff]
        %v282 = vld [vmem:[%s2] sm:$0x1]
        %v283 = vperm.slane %v282, 0
        %v284 = vlaneseq
        %v285 = vshrl.u32 %v284, 7
        %287 = vset.pattern.permute.xlu0 %v285
        %288 = vperm.xlu0 %287, %v283
        %v289 = vpop.permute.xlu0 %288
        %v290 = vlaneseq
        %v291 = vshrl.u32 %v290, 7
        %v292 = vadd.s32 %v291, 8
        %293 = vset.pattern.permute.xlu0 %v292
        %294 = vperm.xlu0 %293, %v283
        %v295 = vpop.permute.xlu0 %294
        %v296 = vlaneseq
        %v297 = vshrl.u32 %v296, 7
        %v298 = vadd.s32 %v297, 16
        %299 = vset.pattern.permute.xlu0 %v298
        %300 = vperm.xlu0 %299, %v283
        %v301 = vpop.permute.xlu0 %300
        %v302 = vlaneseq
        %v303 = vshrl.u32 %v302, 7
        %v304 = vadd.s32 %v303, 24
        %305 = vset.pattern.permute.xlu0 %v304
        %306 = vperm.xlu0 %305, %v283
        %v307 = vpop.permute.xlu0 %306
        %v308 = vlaneseq
        %v309 = vshrl.u32 %v308, 7
        %v310 = vadd.s32 %v309, 32
        %311 = vset.pattern.permute.xlu0 %v310
        %312 = vperm.xlu0 %311, %v283
        %v313 = vpop.permute.xlu0 %312
        %v314 = vlaneseq
        %v315 = vshrl.u32 %v314, 7
        %v316 = vadd.s32 %v315, 40
        %317 = vset.pattern.permute.xlu0 %v316
        %318 = vperm.xlu0 %317, %v283
        %v319 = vpop.permute.xlu0 %318
        %v320 = vlaneseq
        %v321 = vshrl.u32 %v320, 7
        %v322 = vadd.s32 %v321, 48
        %323 = vset.pattern.permute.xlu0 %v322
        %324 = vperm.xlu0 %323, %v283
        %v325 = vpop.permute.xlu0 %324
        %v326 = vlaneseq
        %v327 = vshrl.u32 %v326, 7
        %v328 = vadd.s32 %v327, 56
        %329 = vset.pattern.permute.xlu0 %v328
        %330 = vperm.xlu0 %329, %v283
        %v331 = vpop.permute.xlu0 %330
        %v332 = vlaneseq
        %v333 = vshrl.u32 %v332, 7
        %v334 = vadd.s32 %v333, 64
        %335 = vset.pattern.permute.xlu0 %v334
        %336 = vperm.xlu0 %335, %v283
        %v337 = vpop.permute.xlu0 %336
        %v338 = vlaneseq
        %v339 = vshrl.u32 %v338, 7
        %v340 = vadd.s32 %v339, 72
        %341 = vset.pattern.permute.xlu0 %v340
        %342 = vperm.xlu0 %341, %v283
        %v343 = vpop.permute.xlu0 %342
        %v344 = vlaneseq
        %v345 = vshrl.u32 %v344, 7
        %v346 = vadd.s32 %v345, 80
        %347 = vset.pattern.permute.xlu0 %v346
        %348 = vperm.xlu0 %347, %v283
        %v349 = vpop.permute.xlu0 %348
        %v350 = vlaneseq
        %v351 = vshrl.u32 %v350, 7
        %v352 = vadd.s32 %v351, 88
        %353 = vset.pattern.permute.xlu0 %v352
        %354 = vperm.xlu0 %353, %v283
        %v355 = vpop.permute.xlu0 %354
        %v356 = vlaneseq
        %v357 = vshrl.u32 %v356, 7
        %v358 = vadd.s32 %v357, 96
        %359 = vset.pattern.permute.xlu0 %v358
        %360 = vperm.xlu0 %359, %v283
        %v361 = vpop.permute.xlu0 %360
        %v362 = vlaneseq
        %v363 = vshrl.u32 %v362, 7
        %v364 = vadd.s32 %v363, 104
        %365 = vset.pattern.permute.xlu0 %v364
        %366 = vperm.xlu0 %365, %v283
        %v367 = vpop.permute.xlu0 %366
        %v368 = vlaneseq
        %v369 = vshrl.u32 %v368, 7
        %v370 = vadd.s32 %v369, 112
        %371 = vset.pattern.permute.xlu0 %v370
        %372 = vperm.xlu0 %371, %v283
        %v373 = vpop.permute.xlu0 %372
        %v374 = vlaneseq
        %v375 = vshrl.u32 %v374, 7
        %v376 = vadd.s32 %v375, 120
        %377 = vset.pattern.permute.xlu0 %v376
        %378 = vperm.xlu0 %377, %v283
        %v379 = vpop.permute.xlu0 %378
        %v380 = vld [vmem:[%s4] sm:$0x1]
        %v381 = vperm.slane %v380, 0
        %v382 = vlaneseq
        %v383 = vshrl.u32 %v382, 7
        %385 = vset.pattern.permute.xlu0 %v383
        %386 = vperm.xlu0 %385, %v381
        %v387 = vpop.permute.xlu0 %386
        %v388 = vlaneseq
        %v389 = vshrl.u32 %v388, 7
        %v390 = vadd.s32 %v389, 8
        %391 = vset.pattern.permute.xlu0 %v390
        %392 = vperm.xlu0 %391, %v381
        %v393 = vpop.permute.xlu0 %392
        loop: start=0, step=1, limit=2
        $region45: #{tpu_custom_call.1} parent=39 // loop_pre_header
          _
        $region46: #{tpu_custom_call.1} parent=39 // loop_header
          %s395 = sphi 0, %s399
          %p396 = scmp.ge.s32.totalorder %s395, 2
        $region47: #{tpu_custom_call.1} parent=39 // loop_header_branch
          %398 = sbr.rel (%p396) target = $region51
        $region48: #{tpu_custom_call.1} parent=39 // loop_body
          %s400 = smul.u32 %s395, 16
          %s401 = scalar_lea.vmem %s249, %s400
          %v402 = vld [vmem:[%s401] sm:$0xff]
          %v403 = vld [vmem:[%s401 + $0x8] sm:$0xff]
          %vm404 = vcmask 130048
          %v406 = vsel %vm404, %v264, 0
          %v409 = vsel %vm404, %v265, 0
          %v412 = vsel %vm404, %v266, 0
          %v415 = vsel %vm404, %v267, 0
          %v418 = vsel %vm404, %v268, 0
          %v421 = vsel %vm404, %v269, 0
          %v424 = vsel %vm404, %v270, 0
          %v427 = vsel %vm404, %v271, 0
          %v430 = vsel %vm404, %v272, 0
          %v433 = vsel %vm404, %v273, 0
          %v436 = vsel %vm404, %v274, 0
          %v439 = vsel %vm404, %v275, 0
          %v442 = vsel %vm404, %v276, 0
          %v445 = vsel %vm404, %v277, 0
          %v448 = vsel %vm404, %v278, 0
          %v451 = vsel %vm404, %v279, 0
          %453 = vmatpush.msra.mxu0 0.0
          %454 = vmatpush.msra.mxu0 0.0
          %455 = vmatpush.msra.mxu0 0.0
          %456 = vmatpush.msra.mxu0 0.0
          %457 = vmatpush.msra.mxu0 0.0
          %458 = vmatpush.msra.mxu0 0.0
          %459 = vmatpush.msra.mxu0 0.0
          %460 = vmatpush.msra.mxu0 0.0
          %461 = vmatpush.msra.mxu0 0.0
          %462 = vmatpush.msra.mxu0 0.0
          %463 = vmatpush.msra.mxu0 0.0
          %464 = vmatpush.msra.mxu0 0.0
          %465 = vmatpush.msra.mxu0 0.0
          %466 = vmatpush.msra.mxu0 0.0
          %467 = vmatpush.msra.mxu0 %v403
          %468 = vmatpush.msra.mxu0 %v402
          %469 = vmatmul.f32.gmra.mxu0 %v406
          %v470 = vpop.f32.mrf.mxu0
          %v471 = vadd.f32 %v289, %v470
          %472 = vmatmul.f32.gmra.mxu0 %v409
          %v473 = vpop.f32.mrf.mxu0
          %v474 = vadd.f32 %v295, %v473
          %475 = vmatmul.f32.gmra.mxu0 %v412
          %v476 = vpop.f32.mrf.mxu0
          %v477 = vadd.f32 %v301, %v476
          %478 = vmatmul.f32.gmra.mxu0 %v415
          %v479 = vpop.f32.mrf.mxu0
          %v480 = vadd.f32 %v307, %v479
          %481 = vmatmul.f32.gmra.mxu0 %v418
          %v482 = vpop.f32.mrf.mxu0
          %v483 = vadd.f32 %v313, %v482
          %484 = vmatmul.f32.gmra.mxu0 %v421
          %v485 = vpop.f32.mrf.mxu0
          %v486 = vadd.f32 %v319, %v485
          %487 = vmatmul.f32.gmra.mxu0 %v424
          %v488 = vpop.f32.mrf.mxu0
          %v489 = vadd.f32 %v325, %v488
          %490 = vmatmul.f32.gmra.mxu0 %v427
          %v491 = vpop.f32.mrf.mxu0
          %v492 = vadd.f32 %v331, %v491
          %493 = vmatmul.f32.gmra.mxu0 %v430
          %v494 = vpop.f32.mrf.mxu0
          %v495 = vadd.f32 %v337, %v494
          %496 = vmatmul.f32.gmra.mxu0 %v433
          %v497 = vpop.f32.mrf.mxu0
          %v498 = vadd.f32 %v343, %v497
          %499 = vmatmul.f32.gmra.mxu0 %v436
          %v500 = vpop.f32.mrf.mxu0
          %v501 = vadd.f32 %v349, %v500
          %502 = vmatmul.f32.gmra.mxu0 %v439
          %v503 = vpop.f32.mrf.mxu0
          %v504 = vadd.f32 %v355, %v503
          %505 = vmatmul.f32.gmra.mxu0 %v442
          %v506 = vpop.f32.mrf.mxu0
          %v507 = vadd.f32 %v361, %v506
          %508 = vmatmul.f32.gmra.mxu0 %v445
          %v509 = vpop.f32.mrf.mxu0
          %v510 = vadd.f32 %v367, %v509
          %511 = vmatmul.f32.gmra.mxu0 %v448
          %v512 = vpop.f32.mrf.mxu0
          %v513 = vadd.f32 %v373, %v512
          %514 = vmatmul.f32.gmra.mxu0 %v451
          %v515 = vpop.f32.mrf.mxu0
          %v516 = vadd.f32 %v379, %v515
          %517 = vdwg.mxu0
          %v518 = vmax.f32 %v471, 0.0
          %v519 = vmax.f32 %v474, 0.0
          %v520 = vmax.f32 %v477, 0.0
          %v521 = vmax.f32 %v480, 0.0
          %v522 = vmax.f32 %v483, 0.0
          %v523 = vmax.f32 %v486, 0.0
          %v524 = vmax.f32 %v489, 0.0
          %v525 = vmax.f32 %v492, 0.0
          %v526 = vmax.f32 %v495, 0.0
          %v527 = vmax.f32 %v498, 0.0
          %v528 = vmax.f32 %v501, 0.0
          %v529 = vmax.f32 %v504, 0.0
          %v530 = vmax.f32 %v507, 0.0
          %v531 = vmax.f32 %v510, 0.0
          %v532 = vmax.f32 %v513, 0.0
          %v533 = vmax.f32 %v516, 0.0
          %534 = vmatpush.msra.mxu0 %v533
          %535 = vmatpush.msra.mxu0 %v532
          %536 = vmatpush.msra.mxu0 %v531
          %537 = vmatpush.msra.mxu0 %v530
          %538 = vmatpush.msra.mxu0 %v529
          %539 = vmatpush.msra.mxu0 %v528
          %540 = vmatpush.msra.mxu0 %v527
          %541 = vmatpush.msra.mxu0 %v526
          %542 = vmatpush.msra.mxu0 %v525
          %543 = vmatpush.msra.mxu0 %v524
          %544 = vmatpush.msra.mxu0 %v523
          %545 = vmatpush.msra.mxu0 %v522
          %546 = vmatpush.msra.mxu0 %v521
          %547 = vmatpush.msra.mxu0 %v520
          %548 = vmatpush.msra.mxu0 %v519
          %549 = vmatpush.msra.mxu0 %v518
          %550 = vmatmul.f32.gmra.mxu0 %v280
          %v551 = vpop.f32.mrf.mxu0
          %v552 = vadd.f32 %v387, %v551
          %553 = vmatmul.f32.gmra.mxu0 %v281
          %v554 = vpop.f32.mrf.mxu0
          %v555 = vadd.f32 %v393, %v554
          %556 = vdwg.mxu0
          %vm557 = vcmask 261120
          %v558 = vsel %vm557, %v552, -inf
          %559 = vmax.xlane.f32.xlu0 %v558
          %v560 = vpop.xlane.xlu0 %559
          %v561 = vsel %vm557, %v555, -inf
          %562 = vmax.xlane.f32.xlu0 %v561
          %v563 = vpop.xlane.xlu0 %562
          %v564 = vsub.f32 %v552, %v560
          %v565 = vsub.f32 %v555, %v563
          %v566 = vmul.f32 %v564, 1.442695
          %v567 = vpow.pop %v566
          %v568 = vmul.f32 %v565, 1.442695
          %v569 = vpow.pop %v568
          %v570 = vmul.f32 %v402, %v567
          %v571 = vmul.f32 %v403, %v569
          %v572 = vsel %vm557, %v567, 0.0
          %573 = vadd.xlane.f32.xlu0 %v572
          %v574 = vpop.xlane.xlu0 %573
          %v575 = vsel %vm557, %v569, 0.0
          %576 = vadd.xlane.f32.xlu0 %v575
          %v577 = vpop.xlane.xlu0 %576
          %v578 = vsel %vm557, %v570, 0.0
          %579 = vadd.xlane.f32.xlu0 %v578
          %v580 = vpop.xlane.xlu0 %579
          %v581 = vsel %vm557, %v571, 0.0
          %582 = vadd.xlane.f32.xlu0 %v581
          %v583 = vpop.xlane.xlu0 %582
          %v584 = vmul.f32 %v570, %v402
          %v585 = vmul.f32 %v571, %v403
          %v586 = vsel %vm557, %v584, 0.0
          %587 = vadd.xlane.f32.xlu0 %v586
          %v588 = vpop.xlane.xlu0 %587
          %v589 = vsel %vm557, %v585, 0.0
          %590 = vadd.xlane.f32.xlu0 %v589
          %v591 = vpop.xlane.xlu0 %590
          %s592 = scalar_lea.vmem [#allocation2], %s395
          %v593 = vld [vmem:[%s592] sm:$0x1]
          %v596 = vperm.slane %v560, 0
          %v597 = vperm.slane %v560, 1
          %v598 = vperm.slane %v560, 2
          %v599 = vperm.slane %v560, 3
          %v600 = vperm.slane %v560, 4
          %v601 = vperm.slane %v560, 5
          %v602 = vperm.slane %v560, 6
          %v603 = vperm.slane %v560, 7
          %v604 = vperm.slane %v563, 0
          %v605 = vperm.slane %v563, 1
          %v606 = vperm.slane %v563, 2
          %v607 = vperm.slane %v563, 3
          %v608 = vperm.slane %v563, 4
          %v609 = vperm.slane %v563, 5
          %v610 = vperm.slane %v563, 6
          %v611 = vperm.slane %v563, 7
          %612 = vst [vmem:[#allocation1] ss:$9 sm:$0xff] %v596
          %s613 = scalar_lea.vmem [#allocation1], 1
          %614 = vst [vmem:[%s613] ss:$9 sm:$0xff] %v597
          %s615 = scalar_lea.vmem [#allocation1], 2
          %616 = vst [vmem:[%s615] ss:$9 sm:$0xff] %v598
          %s617 = scalar_lea.vmem [#allocation1], 3
          %618 = vst [vmem:[%s617] ss:$9 sm:$0xff] %v599
          %s619 = scalar_lea.vmem [#allocation1], 4
          %620 = vst [vmem:[%s619] ss:$9 sm:$0xff] %v600
          %s621 = scalar_lea.vmem [#allocation1], 5
          %622 = vst [vmem:[%s621] ss:$9 sm:$0xff] %v601
          %s623 = scalar_lea.vmem [#allocation1], 6
          %624 = vst [vmem:[%s623] ss:$9 sm:$0xff] %v602
          %s625 = scalar_lea.vmem [#allocation1], 7
          %626 = vst [vmem:[%s625] ss:$9 sm:$0xff] %v603
          %v627 = vld [vmem:[#allocation1] sm:$0xff]
          %628 = vst [vmem:[#allocation1] ss:$9 sm:$0xff] %v604
          %629 = vst [vmem:[%s613] ss:$9 sm:$0xff] %v605
          %630 = vst [vmem:[%s615] ss:$9 sm:$0xff] %v606
          %631 = vst [vmem:[%s617] ss:$9 sm:$0xff] %v607
          %632 = vst [vmem:[%s619] ss:$9 sm:$0xff] %v608
          %633 = vst [vmem:[%s621] ss:$9 sm:$0xff] %v609
          %634 = vst [vmem:[%s623] ss:$9 sm:$0xff] %v610
          %635 = vst [vmem:[%s625] ss:$9 sm:$0xff] %v611
          %v636 = vld [vmem:[#allocation1] sm:$0xff]
          %637 = vset.pattern.permute.xlu0 0
          %638 = vperm.xlu0 %637, %v627
          %v639 = vpop.permute.xlu0 %638
          %640 = vset.pattern.permute.xlu0 0
          %641 = vperm.xlu0 %640, %v636
          %v642 = vpop.permute.xlu0 %641
          %v643 = vlaneseq
          %v644 = vand.u32 %v643, 127
          %v645 = vperm.slane %v639, %v644
          %v646 = vadd.s32 %v644, 4294967288
          %v647 = vperm.slane %v642, %v646
          %vm648 = vcmask 130112
          %v649 = vsel %vm648, %v647, %v645
          %v651 = vmax.f32 %v593, %v649
          %v652 = vsub.f32 %v593, %v651
          %v653 = vmul.f32 %v652, 1.442695
          %v654 = vpow.pop %v653
          %v656 = vperm.slane %v651, 0
          %v657 = vlaneseq
          %v658 = vshrl.u32 %v657, 7
          %660 = vset.pattern.permute.xlu0 %v658
          %661 = vperm.xlu0 %660, %v656
          %v662 = vpop.permute.xlu0 %661
          %v663 = vlaneseq
          %v664 = vshrl.u32 %v663, 7
          %v665 = vadd.s32 %v664, 8
          %666 = vset.pattern.permute.xlu0 %v665
          %667 = vperm.xlu0 %666, %v656
          %v668 = vpop.permute.xlu0 %667
          %v671 = vsub.f32 %v560, %v662
          %v672 = vsub.f32 %v563, %v668
          %v673 = vmul.f32 %v671, 1.442695
          %v674 = vpow.pop %v673
          %v675 = vmul.f32 %v672, 1.442695
          %v676 = vpow.pop %v675
          %s677 = scalar_lea.vmem [#allocation3], %s395
          %v678 = vld [vmem:[%s677] sm:$0x1]
          %v679 = vmul.f32 %v678, %v654
          %v680 = vmul.f32 %v574, %v674
          %v681 = vmul.f32 %v577, %v676
          %v684 = vrot.slane %v680, 1
          %v685 = vrot.slane %v680, 2
          %v686 = vrot.slane %v680, 3
          %v687 = vrot.slane %v680, 4
          %v688 = vrot.slane %v680, 5
          %v689 = vrot.slane %v680, 6
          %v690 = vrot.slane %v680, 7
          %v691 = vrot.slane %v681, 1
          %v692 = vrot.slane %v681, 2
          %v693 = vrot.slane %v681, 3
          %v694 = vrot.slane %v681, 4
          %v695 = vrot.slane %v681, 5
          %v696 = vrot.slane %v681, 6
          %v697 = vrot.slane %v681, 7
          %698 = vst [vmem:[#allocation1] ss:$9 sm:$0xff] %v680
          %s699 = scalar_lea.vmem [#allocation1], 1
          %700 = vst [vmem:[%s699] ss:$9 sm:$0xff] %v684
          %s701 = scalar_lea.vmem [#allocation1], 2
          %702 = vst [vmem:[%s701] ss:$9 sm:$0xff] %v685
          %s703 = scalar_lea.vmem [#allocation1], 3
          %704 = vst [vmem:[%s703] ss:$9 sm:$0xff] %v686
          %s705 = scalar_lea.vmem [#allocation1], 4
          %706 = vst [vmem:[%s705] ss:$9 sm:$0xff] %v687
          %s707 = scalar_lea.vmem [#allocation1], 5
          %708 = vst [vmem:[%s707] ss:$9 sm:$0xff] %v688
          %s709 = scalar_lea.vmem [#allocation1], 6
          %710 = vst [vmem:[%s709] ss:$9 sm:$0xff] %v689
          %s711 = scalar_lea.vmem [#allocation1], 7
          %712 = vst [vmem:[%s711] ss:$9 sm:$0xff] %v690
          %v713 = vld [vmem:[#allocation1] sm:$0xff]
          %714 = vst [vmem:[#allocation1] ss:$9 sm:$0xff] %v681
          %715 = vst [vmem:[%s699] ss:$9 sm:$0xff] %v691
          %716 = vst [vmem:[%s701] ss:$9 sm:$0xff] %v692
          %717 = vst [vmem:[%s703] ss:$9 sm:$0xff] %v693
          %718 = vst [vmem:[%s705] ss:$9 sm:$0xff] %v694
          %719 = vst [vmem:[%s707] ss:$9 sm:$0xff] %v695
          %720 = vst [vmem:[%s709] ss:$9 sm:$0xff] %v696
          %721 = vst [vmem:[%s711] ss:$9 sm:$0xff] %v697
          %v722 = vld [vmem:[#allocation1] sm:$0xff]
          %723 = vset.pattern.permute.xlu0 0
          %724 = vperm.xlu0 %723, %v713
          %v725 = vpop.permute.xlu0 %724
          %726 = vset.pattern.permute.xlu0 0
          %727 = vperm.xlu0 %726, %v722
          %v728 = vpop.permute.xlu0 %727
          %v729 = vperm.slane %v725, %v644
          %v730 = vperm.slane %v728, %v646
          %v731 = vsel %vm648, %v730, %v729
          %v733 = vadd.f32 %v679, %v731
          %vm734 = vcmask 122880
          %735 = vst.msk [vmem:[%s677] sm:$0x1] %vm734, %v733
          %s736 = scalar_lea.vmem [#allocation4], %s395
          %v737 = vld [vmem:[%s736] sm:$0x1]
          %v738 = vmul.f32 %v737, %v654
          %v739 = vmul.f32 %v580, %v674
          %v740 = vmul.f32 %v583, %v676
          %v743 = vrot.slane %v739, 1
          %v744 = vrot.slane %v739, 2
          %v745 = vrot.slane %v739, 3
          %v746 = vrot.slane %v739, 4
          %v747 = vrot.slane %v739, 5
          %v748 = vrot.slane %v739, 6
          %v749 = vrot.slane %v739, 7
          %v750 = vrot.slane %v740, 1
          %v751 = vrot.slane %v740, 2
          %v752 = vrot.slane %v740, 3
          %v753 = vrot.slane %v740, 4
          %v754 = vrot.slane %v740, 5
          %v755 = vrot.slane %v740, 6
          %v756 = vrot.slane %v740, 7
          %757 = vst [vmem:[#allocation1] ss:$9 sm:$0xff] %v739
          %s758 = scalar_lea.vmem [#allocation1], 1
          %759 = vst [vmem:[%s758] ss:$9 sm:$0xff] %v743
          %s760 = scalar_lea.vmem [#allocation1], 2
          %761 = vst [vmem:[%s760] ss:$9 sm:$0xff] %v744
          %s762 = scalar_lea.vmem [#allocation1], 3
          %763 = vst [vmem:[%s762] ss:$9 sm:$0xff] %v745
          %s764 = scalar_lea.vmem [#allocation1], 4
          %765 = vst [vmem:[%s764] ss:$9 sm:$0xff] %v746
          %s766 = scalar_lea.vmem [#allocation1], 5
          %767 = vst [vmem:[%s766] ss:$9 sm:$0xff] %v747
          %s768 = scalar_lea.vmem [#allocation1], 6
          %769 = vst [vmem:[%s768] ss:$9 sm:$0xff] %v748
          %s770 = scalar_lea.vmem [#allocation1], 7
          %771 = vst [vmem:[%s770] ss:$9 sm:$0xff] %v749
          %v772 = vld [vmem:[#allocation1] sm:$0xff]
          %773 = vst [vmem:[#allocation1] ss:$9 sm:$0xff] %v740
          %774 = vst [vmem:[%s758] ss:$9 sm:$0xff] %v750
          %775 = vst [vmem:[%s760] ss:$9 sm:$0xff] %v751
          %776 = vst [vmem:[%s762] ss:$9 sm:$0xff] %v752
          %777 = vst [vmem:[%s764] ss:$9 sm:$0xff] %v753
          %778 = vst [vmem:[%s766] ss:$9 sm:$0xff] %v754
          %779 = vst [vmem:[%s768] ss:$9 sm:$0xff] %v755
          %780 = vst [vmem:[%s770] ss:$9 sm:$0xff] %v756
          %v781 = vld [vmem:[#allocation1] sm:$0xff]
          %782 = vset.pattern.permute.xlu0 0
          %783 = vperm.xlu0 %782, %v772
          %v784 = vpop.permute.xlu0 %783
          %785 = vset.pattern.permute.xlu0 0
          %786 = vperm.xlu0 %785, %v781
          %v787 = vpop.permute.xlu0 %786
          %v788 = vperm.slane %v784, %v644
          %v789 = vperm.slane %v787, %v646
          %v790 = vsel %vm648, %v789, %v788
          %v792 = vadd.f32 %v738, %v790
          %793 = vst.msk [vmem:[%s736] sm:$0x1] %vm734, %v792
          %s794 = scalar_lea.vmem [#allocation5], %s395
          %v795 = vld [vmem:[%s794] sm:$0x1]
          %v796 = vmul.f32 %v795, %v654
          %v797 = vmul.f32 %v588, %v674
          %v798 = vmul.f32 %v591, %v676
          %v801 = vrot.slane %v797, 1
          %v802 = vrot.slane %v797, 2
          %v803 = vrot.slane %v797, 3
          %v804 = vrot.slane %v797, 4
          %v805 = vrot.slane %v797, 5
          %v806 = vrot.slane %v797, 6
          %v807 = vrot.slane %v797, 7
          %v808 = vrot.slane %v798, 1
          %v809 = vrot.slane %v798, 2
          %v810 = vrot.slane %v798, 3
          %v811 = vrot.slane %v798, 4
          %v812 = vrot.slane %v798, 5
          %v813 = vrot.slane %v798, 6
          %v814 = vrot.slane %v798, 7
          %815 = vst [vmem:[#allocation1] ss:$9 sm:$0xff] %v797
          %s816 = scalar_lea.vmem [#allocation1], 1
          %817 = vst [vmem:[%s816] ss:$9 sm:$0xff] %v801
          %s818 = scalar_lea.vmem [#allocation1], 2
          %819 = vst [vmem:[%s818] ss:$9 sm:$0xff] %v802
          %s820 = scalar_lea.vmem [#allocation1], 3
          %821 = vst [vmem:[%s820] ss:$9 sm:$0xff] %v803
          %s822 = scalar_lea.vmem [#allocation1], 4
          %823 = vst [vmem:[%s822] ss:$9 sm:$0xff] %v804
          %s824 = scalar_lea.vmem [#allocation1], 5
          %825 = vst [vmem:[%s824] ss:$9 sm:$0xff] %v805
          %s826 = scalar_lea.vmem [#allocation1], 6
          %827 = vst [vmem:[%s826] ss:$9 sm:$0xff] %v806
          %s828 = scalar_lea.vmem [#allocation1], 7
          %829 = vst [vmem:[%s828] ss:$9 sm:$0xff] %v807
          %v830 = vld [vmem:[#allocation1] sm:$0xff]
          %831 = vst [vmem:[#allocation1] ss:$9 sm:$0xff] %v798
          %832 = vst [vmem:[%s816] ss:$9 sm:$0xff] %v808
          %833 = vst [vmem:[%s818] ss:$9 sm:$0xff] %v809
          %834 = vst [vmem:[%s820] ss:$9 sm:$0xff] %v810
          %835 = vst [vmem:[%s822] ss:$9 sm:$0xff] %v811
          %836 = vst [vmem:[%s824] ss:$9 sm:$0xff] %v812
          %837 = vst [vmem:[%s826] ss:$9 sm:$0xff] %v813
          %838 = vst [vmem:[%s828] ss:$9 sm:$0xff] %v814
          %v839 = vld [vmem:[#allocation1] sm:$0xff]
          %840 = vset.pattern.permute.xlu0 0
          %841 = vperm.xlu0 %840, %v830
          %v842 = vpop.permute.xlu0 %841
          %843 = vset.pattern.permute.xlu0 0
          %844 = vperm.xlu0 %843, %v839
          %v845 = vpop.permute.xlu0 %844
          %v846 = vperm.slane %v842, %v644
          %v847 = vperm.slane %v845, %v646
          %v848 = vsel %vm648, %v847, %v846
          %v850 = vadd.f32 %v796, %v848
          %851 = vst.msk [vmem:[%s794] sm:$0x1] %vm734, %v850
          %852 = vst.msk [vmem:[%s592] sm:$0x1] %vm734, %v651
        $region49: #{tpu_custom_call.1} parent=39 // loop_footer
          %s399 = sadd.s32 1, %s395
        $region50: #{tpu_custom_call.1} parent=39 // loop_footer_branch
          %394 = sbr.rel target = $region46
        $region51: #{tpu_custom_call.1} parent=39 // loop_exit
          _
        // Predicated region
        $region52: #{tpu_custom_call.1} parent=39 // pred_check
          %p853 = pneg %p251
        $region53: #{tpu_custom_call.1} parent=39 // pred_check_branch
          %855 = sbr.rel (%p853) target = $region55
        $region54: #{tpu_custom_call.1} parent=39 // pred_region
          %v856 = vld [vmem:[#allocation3] sm:$0x1]
          %v857 = vld [vmem:[#allocation3 + $0x1] sm:$0x1]
          %v858 = vld [vmem:[#allocation4] sm:$0x1]
          %v859 = vld [vmem:[#allocation4 + $0x1] sm:$0x1]
          %v860 = vld [vmem:[#allocation5] sm:$0x1]
          %v861 = vld [vmem:[#allocation5 + $0x1] sm:$0x1]
          %v862 = vrcp.pop %v856
          %v863 = vmul.f32 %v856, %v862
          %v864 = vsub.f32 1.0, %v863
          %v865 = vmul.f32 %v862, %v864
          %v866 = vadd.f32 %v862, %v865
          %vm867 = vweird.f32 %v856
          %vm868 = vweird.f32 %v862
          %vm869 = vmor %vm867, %vm868
          %v870 = vsel %vm869, %v862, %v866
          %v871 = vand.u32 2147483647, %v856
          %vm872 = vcmp.eq.f32.partialorder %v871, 8.507059e+37
          %v873 = vand.u32 %v856, 2147483648
          %v874 = vor.u32 1.1754944e-38, %v873
          %v875 = vsel %vm872, %v874, %v870
          %v876 = vrcp.pop %v857
          %v877 = vmul.f32 %v857, %v876
          %v878 = vsub.f32 1.0, %v877
          %v879 = vmul.f32 %v876, %v878
          %v880 = vadd.f32 %v876, %v879
          %vm881 = vweird.f32 %v857
          %vm882 = vweird.f32 %v876
          %vm883 = vmor %vm881, %vm882
          %v884 = vsel %vm883, %v876, %v880
          %v885 = vand.u32 2147483647, %v857
          %vm886 = vcmp.eq.f32.partialorder %v885, 8.507059e+37
          %v887 = vand.u32 %v857, 2147483648
          %v888 = vor.u32 1.1754944e-38, %v887
          %v889 = vsel %vm886, %v888, %v884
          %v890 = vmul.f32 %v858, %v875
          %v891 = vmul.f32 %v859, %v889
          %v892 = vmul.f32 %v860, %v875
          %v893 = vmul.f32 %v861, %v889
          %v894 = vmul.f32 %v890, %v890
          %v895 = vmul.f32 %v891, %v891
          %v896 = vsub.f32 %v892, %v894
          %v897 = vsub.f32 %v893, %v895
          %v898 = vmax.f32 %v896, 1e-05
          %v899 = vmax.f32 %v897, 1e-05
          %v900 = vrsqrt.pop %v898
          %v901 = vmul.f32 %v900, %v898
          %v902 = vmul.f32 %v901, %v900
          %v903 = vmul.f32 0.5, %v902
          %v904 = vsub.f32 1.5, %v903
          %v905 = vmul.f32 %v900, %v904
          %v906 = vmul.f32 %v898, %v905
          %vm907 = vcmp.eq.f32.partialorder %v898, inf
          %v908 = vsel %vm907, %v898, %v906
          %vm909 = vcmp.eq.f32.partialorder %v898, 0.0
          %v910 = vand.u32 %v898, 2147483648
          %v911 = vsel %vm909, %v910, %v908
          %v912 = vrsqrt.pop %v899
          %v913 = vmul.f32 %v912, %v899
          %v914 = vmul.f32 %v913, %v912
          %v915 = vmul.f32 0.5, %v914
          %v916 = vsub.f32 1.5, %v915
          %v917 = vmul.f32 %v912, %v916
          %v918 = vmul.f32 %v899, %v917
          %vm919 = vcmp.eq.f32.partialorder %v899, inf
          %v920 = vsel %vm919, %v899, %v918
          %vm921 = vcmp.eq.f32.partialorder %v899, 0.0
          %v922 = vand.u32 %v899, 2147483648
          %v923 = vsel %vm921, %v922, %v920
          %926 = vst [vmem:[#allocation1] ss:$9 sm:$0xff] %v890
          %s927 = scalar_lea.vmem [#allocation1], 1
          %928 = vst [vmem:[%s927] ss:$9 sm:$0xff] %v891
          %v929 = vld [vmem:[#allocation1] sm:$0xff]
          %933 = vst [vmem:[#allocation1] ss:$9 sm:$0xff] %v911
          %s934 = scalar_lea.vmem [#allocation1], 1
          %935 = vst [vmem:[%s934] ss:$9 sm:$0xff] %v923
          %v936 = vld [vmem:[#allocation1] sm:$0xff]
          %937 = vrot.lane.b32.xlu0 %v936, 16
          %v938 = vpop.permute.xlu0 %937
          %vm940 = vcmask 130048
          %v941 = vsel %vm940, %v929, %v938
          %vm942 = vcmask 254976
          %943 = vst.msk [vmem:[%s240] sm:$0x3] %vm942, %v941
        $region55: #{tpu_custom_call.1} parent=39 // pred_fallthru
          _
        %s944 = sand.u32 %s151, 1
        %s945 = scalar_lea.sflag [#allocation7], %s944
        %s946 = sand.u32 %s151, 1
        %s947 = smul.addr %s946, 2
        %s948 = scalar_lea.vmem [#allocation6], %s947
        // Predicated region
        $region56: #{tpu_custom_call.1} parent=39 // pred_check
          %p949 = pneg %p161
        $region57: #{tpu_custom_call.1} parent=39 // pred_check_branch
          %951 = sbr.rel (%p949) target = $region59
        $region58: #{tpu_custom_call.1} parent=39 // pred_region
          %953 = vsyncadd %s945, 0
          %s954 = smul.addr %s23, 2
          %s955 = scalar_lea.hbm %s5, %s954
          %s957 = sshll.u32 %s948, 4
          %s958 = int_to_ptr.vmem [resolvable:$true] %s957
          %s959 = sshll.u32 %s955, 4
          %s960 = int_to_ptr.hbm [resolvable:$true] %s959
          %962 = dma.vmem_to_hbm [thread:$0]  %s958, 32, %s960, %s945
        $region59: #{tpu_custom_call.1} parent=39 // pred_fallthru
          _
      $region40: #{tpu_custom_call.1} parent=5 // pred_fallthru
        _
      %p963 = scmp.le.s32.totalorder 2, %s14
      // Predicated region
      $region60: #{tpu_custom_call.1} parent=5 // pred_check
        %p964 = pneg %p963
      $region61: #{tpu_custom_call.1} parent=5 // pred_check_branch
        %966 = sbr.rel (%p964) target = $region63
      $region62: #{tpu_custom_call.1} parent=5 // pred_region
        %s967 = ssub.s32 %s14, 2
        // Predicated region
        $region64: #{tpu_custom_call.1} parent=62 // pred_check
          %p968 = pneg %p167
        $region65: #{tpu_custom_call.1} parent=62 // pred_check_branch
          %970 = sbr.rel (%p968) target = $region67
        $region66: #{tpu_custom_call.1} parent=62 // pred_region
          %s971 = sand.u32 %s152, 1
          %s972 = scalar_lea.sflag [#allocation7], %s971
          %s973 = sand.u32 %s152, 1
          %s974 = smul.addr %s973, 2
          %s975 = scalar_lea.vmem [#allocation6], %s974
          %977 = dma.done %s972, 32
        $region67: #{tpu_custom_call.1} parent=62 // pred_fallthru
          _
      $region63: #{tpu_custom_call.1} parent=5 // pred_fallthru
        _
    $region6: #{tpu_custom_call.1} parent=1 // loop_footer
      %s18 = sadd.s32 1, %s14
    $region7: #{tpu_custom_call.1} parent=1 // loop_footer_branch
      %13 = sbr.rel target = $region3
    $region8: #{tpu_custom_call.1} parent=1 // loop_exit
      _
    %978 = vsyncpa [#allocation7], 1
    %s979 = scalar_lea.sflag [#allocation7], 1
    %980 = vsyncpa %s979, 1

</llo_original>
